<compile_context>
chip_gen: v7x
topology: tpu7x:2x2x1
jax: 0.10.0
libtpu: 0.0.40
codegen_flags: <defaults>
</compile_context>

<pallas_src>
import jax
import jax.numpy as jnp
from jax.experimental import pallas as pl
from jax.experimental.pallas import tpu as pltpu


# ----------------------------------------------------------------------------
# Pallas kernel: out = G * Fy (complex, elementwise), G broadcast over batch.
# Blocks: fy_ref/out_ref (2, TB, TN)   [0]=re, [1]=im
#         g_ref          (2, 1,  TN)
# ----------------------------------------------------------------------------
def _wiener_gain_mul_kernel(fy_ref, g_ref, out_ref):
    fr = fy_ref[0]                     # (TB, TN)
    fi = fy_ref[1]
    gr = g_ref[0]                      # (1, TN) — sublane-broadcast over batch
    gi = g_ref[1]
    out_ref[0] = gr * fr - gi * fi
    out_ref[1] = gr * fi + gi * fr


def wiener_apply_gain(Fy, G):
    """Apply the precomputed Wiener gain in the (one-sided) frequency domain.

    Fy : (B, C, Hp, Wr) complex64  rfft2 spectrum of the tapered/padded image
    G  : (C, Hp, Wr)    complex64  conj(Dk) * Omega  (batch-independent gain)
    Returns (out_re, out_im) float32 planes of shape (B, C, Hp, Wr).
    """
    B, C, Hp, Wr = Fy.shape
    N = C * Hp * Wr
    LANE = 128

    # Planar re/im packing -> only 3 DMA streams per grid step.  These stacks
    # are single fused XLA passes; no explicit padding is done (Pallas masks
    # the ragged last block along both the batch and the flattened freq axis).
    fy = jnp.stack([jnp.real(Fy), jnp.imag(Fy)], axis=0).astype(jnp.float32)
    fy = fy.reshape(2, B, N)
    g = jnp.stack([jnp.real(G), jnp.imag(G)], axis=0).astype(jnp.float32)
    g = g.reshape(2, 1, N)

    # Tiling: sublane tile = full batch (<=64) or 64; lane tile sized so the
    # (2, TB, TN) f32 fy/out blocks are ~4 MiB, capped at 32768 lanes.  Total
    # double-buffered working set stays well under v7x's 64 MiB physical VMEM.
    TB = B if B <= 64 else 64
    fy_block_budget = 4 * 1024 * 1024                      # bytes per fy block
    tn_budget = max(LANE, (fy_block_budget // (2 * TB * 4)) // LANE * LANE)
    TN = min(32768, tn_budget, pl.cdiv(N, LANE) * LANE)
    nn = pl.cdiv(N, TN)
    nb = pl.cdiv(B, TB)

    bytes_accessed = 4 * (2 * B * N * 2 + 2 * N)           # fy + out + g
    cost = pl.CostEstimate(flops=6 * B * N, transcendentals=0,
                           bytes_accessed=bytes_accessed)

    out = pl.pallas_call(
        _wiener_gain_mul_kernel,
        out_shape=jax.ShapeDtypeStruct((2, B, N), jnp.float32),
        # Batch axis innermost: the gain block index is constant across the
        # inner loop, so G stays resident in VMEM instead of being re-DMA'd.
        # nn is the outer "parallel" axis so v7x can shard it across its 2 TCs.
        grid=(nn, nb),
        in_specs=[
            pl.BlockSpec((2, TB, TN), lambda n, b: (0, b, n)),   # Fy (re/im)
            pl.BlockSpec((2, 1, TN), lambda n, b: (0, 0, n)),    # G  (re/im)
        ],
        out_specs=pl.BlockSpec((2, TB, TN), lambda n, b: (0, b, n)),
        compiler_params=pltpu.CompilerParams(
            dimension_semantics=("parallel", "parallel"),
            vmem_limit_bytes=48 * 1024 * 1024),
        cost_estimate=cost,
    )(fy, g)

    # Leading-dim slices + reshape are contiguous views; they fuse into the
    # complex construction for irfft2 (no extra HBM pass).
    out_re = out[0].reshape(B, C, Hp, Wr)
    out_im = out[1].reshape(B, C, Hp, Wr)
    return out_re, out_im


# ----------------------------------------------------------------------------
# Plain-JAX glue (FFT-based; no Pallas FFT primitive exists).
# ----------------------------------------------------------------------------
def psf2otf_r(psf, shape):
    """Zero-pad PSF to `shape`, circularly shift center to (0,0), one-sided FFT."""
    kh, kw = psf.shape[-2], psf.shape[-1]
    H, W = shape
    padded = jnp.zeros(psf.shape[:-2] + (H, W), psf.dtype)
    padded = padded.at[..., :kh, :kw].set(psf)
    padded = jnp.roll(padded, shift=(-(kh // 2), -(kw // 2)), axis=(-2, -1))
    return jnp.fft.rfft2(padded)


def pad_for_kernel(y, k):
    ph = (k.shape[-2] - 1) // 2
    pw = (k.shape[-1] - 1) // 2
    return jnp.pad(y, ((0, 0), (0, 0), (ph, ph), (pw, pw)), mode="edge")


def edgetaper_alpha(k, img_shape):
    # TODO(synk): edgetaper_torch source not provided; standard FDN/MATLAB-style
    # taper window built from autocorrelations of the kernel projections.
    v = []
    for i in range(2):
        proj = jnp.sum(k, axis=1 - i)
        z = jnp.fft.fft(proj, n=img_shape[i] - 1)
        z = jnp.real(jnp.fft.ifft(jnp.abs(z) ** 2))
        z = jnp.concatenate([z, z[:1]], axis=0)
        v.append(1.0 - z / jnp.max(z))
    return jnp.outer(v[0], v[1])


def edgetaper(img, k, n_tapers=3):
    Hp, Wp = img.shape[-2], img.shape[-1]
    alpha = edgetaper_alpha(k, (Hp, Wp))[None, None]          # (1,1,Hp,Wp)
    otf_k = psf2otf_r(k, (Hp, Wp))                            # (Hp, Wr)
    for _ in range(n_tapers):
        blurred = jnp.fft.irfft2(jnp.fft.rfft2(img) * otf_k, s=(Hp, Wp))
        img = alpha * img + (1.0 - alpha) * blurred
    return img


def wiener_deconvolution_forward(inputs, lam1, filters1):
    """Forward pass of the WienerDeconvolution module."""
    y, k = inputs                                   # y: (B,C,H,W), k: (kh,kw)
    x = edgetaper(pad_for_kernel(y, k), k)          # (B, C, Hp, Wp)
    B, C, Hp, Wp = x.shape

    # torch.rfft(x, 2, onesided=False) is the full complex FFT of a real input,
    # whose spectrum is Hermitian; working on the one-sided rfft2 half-plane and
    # finishing with irfft2 is mathematically identical and halves the data.
    Fy = jnp.fft.rfft2(x)                           # (B, C, Hp, Wr) complex64
    Dk = psf2otf_r(k, (Hp, Wp))                     # (Hp, Wr) complex
    Dg = psf2otf_r(filters1, (Hp, Wp))              # (NF, C, Hp, Wr) complex

    # Batch-independent Wiener gain, precomputed once in plain JAX:
    #   Omega = 1 / (|Dk|^2 + exp(lam) * sum_f |Dg_f|^2)       (C, Hp, Wr)
    #   G     = Omega * conj(Dk)                               (C, Hp, Wr)
    # NOTE: no epsilon in the denominator — matches the PyTorch reference.
    dg_sum = jnp.sum(jnp.real(Dg) ** 2 + jnp.imag(Dg) ** 2, axis=0)
    dk_abs2 = jnp.real(Dk) ** 2 + jnp.imag(Dk) ** 2
    omega = 1.0 / (dk_abs2[None, :, :] + jnp.exp(lam1) * dg_sum)
    G = (omega * jnp.conj(Dk)[None, :, :]).astype(jnp.complex64)

    # Pallas hot path: out_freq = G * Fy  (per-batch complex multiply).
    out_re, out_im = wiener_apply_gain(Fy, G)

    # torch.irfft(., 2, onesided=False) == real inverse transform.
    out = jnp.fft.irfft2(jax.lax.complex(out_re, out_im), s=(Hp, Wp))
    return out.astype(jnp.float32)


# ----------------------------------------------------------------------------
if __name__ == "__main__":
    key = jax.random.PRNGKey(0)
    k_y, k_k, k_lam, k_w = jax.random.split(key, 4)

    B, C, H, W = 2, 3, 16, 16
    n_filters, filter_size = 8, 3
    blur_size = 5

    # Inputs: blurry image y and blur kernel k (normalized to sum 1).
    y = jax.random.uniform(k_y, (B, C, H, W), dtype=jnp.float32)
    k = jax.random.uniform(k_k, (blur_size, blur_size), dtype=jnp.float32)
    k = k / jnp.sum(k)

    # Parameters (deterministic synthetic init matching the module's __init__):
    #   lam1     = torch.rand(1).squeeze()  -> uniform scalar
    #   filters1 = kaiming_normal_(zeros(n_filters, 3, fs, fs)) -> N(0, 2/fan_in)
    lam1 = jax.random.uniform(k_lam, (), dtype=jnp.float32)
    fan_in = C * filter_size * filter_size
    filters1 = (jax.random.normal(
        k_w, (n_filters, C, filter_size, filter_size), dtype=jnp.float32)
        * jnp.sqrt(2.0 / fan_in))

    out = jax.jit(wiener_deconvolution_forward)((y, k), lam1, filters1)
    jax.block_until_ready(out)
    assert out.shape == (B, C, H + blur_size - 1, W + blur_size - 1)
    print("KERNEL_OK")
</pallas_src>

<mosaic_0001>
module attributes {stable_mosaic.version = 11 : i64} {
  func.func @_wiener_gain_mul_kernel(%arg0: i32, %arg1: i32, %arg2: memref<2x2x768xf32, #tpu.memory_space<vmem>>, %arg3: memref<2x1x768xf32, #tpu.memory_space<vmem>>, %arg4: memref<2x2x768xf32, #tpu.memory_space<vmem>>) attributes {dimension_semantics = [#tpu.dimension_semantics<parallel>, #tpu.dimension_semantics<parallel>], iteration_bounds = array<i64: 1, 1>, scalar_prefetch = 0 : i64, scratch_operands = 0 : i64, tpu.core_type = #tpu.core_type<tc>, window_params = [{transform_indices = @transform_0, window_bounds = array<i64: 2, 2, 768>}, {transform_indices = @transform_1, window_bounds = array<i64: 2, 1, 768>}, {transform_indices = @transform_2, window_bounds = array<i64: 2, 2, 768>}]} {
    %c0 = arith.constant 0 : index
    %c0_0 = arith.constant 0 : index
    %c0_1 = arith.constant 0 : index
    %0 = vector.load %arg2[%c0, %c0_0, %c0_1] : memref<2x2x768xf32, #tpu.memory_space<vmem>>, vector<1x2x768xf32>
    %1 = vector.shape_cast %0 : vector<1x2x768xf32> to vector<2x768xf32>
    %c1 = arith.constant 1 : index
    %c0_2 = arith.constant 0 : index
    %c0_3 = arith.constant 0 : index
    %2 = vector.load %arg2[%c1, %c0_2, %c0_3] : memref<2x2x768xf32, #tpu.memory_space<vmem>>, vector<1x2x768xf32>
    %3 = vector.shape_cast %2 : vector<1x2x768xf32> to vector<2x768xf32>
    %c0_4 = arith.constant 0 : index
    %c0_5 = arith.constant 0 : index
    %c0_6 = arith.constant 0 : index
    %4 = vector.load %arg3[%c0_4, %c0_5, %c0_6] : memref<2x1x768xf32, #tpu.memory_space<vmem>>, vector<1x1x768xf32>
    %5 = vector.shape_cast %4 : vector<1x1x768xf32> to vector<1x768xf32>
    %c1_7 = arith.constant 1 : index
    %c0_8 = arith.constant 0 : index
    %c0_9 = arith.constant 0 : index
    %6 = vector.load %arg3[%c1_7, %c0_8, %c0_9] : memref<2x1x768xf32, #tpu.memory_space<vmem>>, vector<1x1x768xf32>
    %7 = vector.shape_cast %6 : vector<1x1x768xf32> to vector<1x768xf32>
    %8 = vector.broadcast %5 : vector<1x768xf32> to vector<2x768xf32>
    %9 = arith.mulf %8, %1 : vector<2x768xf32>
    %10 = vector.broadcast %7 : vector<1x768xf32> to vector<2x768xf32>
    %11 = arith.mulf %10, %3 : vector<2x768xf32>
    %12 = arith.subf %9, %11 : vector<2x768xf32>
    %c0_10 = arith.constant 0 : index
    %c0_11 = arith.constant 0 : index
    %c0_12 = arith.constant 0 : index
    %13 = vector.load %arg4[%c0_10, %c0_11, %c0_12] : memref<2x2x768xf32, #tpu.memory_space<vmem>>, vector<1x2x768xf32>
    %14 = vector.shape_cast %13 : vector<1x2x768xf32> to vector<2x768xf32>
    %15 = vector.shape_cast %12 : vector<2x768xf32> to vector<1x2x768xf32>
    tpu.vector_store %arg4[%c0_10, %c0_11, %c0_12], %15 {strides = array<i32>} : memref<2x2x768xf32, #tpu.memory_space<vmem>>, vector<1x2x768xf32>,
    %16 = vector.broadcast %5 : vector<1x768xf32> to vector<2x768xf32>
    %17 = arith.mulf %16, %3 : vector<2x768xf32>
    %18 = vector.broadcast %7 : vector<1x768xf32> to vector<2x768xf32>
    %19 = arith.mulf %18, %1 : vector<2x768xf32>
    %20 = arith.addf %17, %19 : vector<2x768xf32>
    %c1_13 = arith.constant 1 : index
    %c0_14 = arith.constant 0 : index
    %c0_15 = arith.constant 0 : index
    %21 = vector.load %arg4[%c1_13, %c0_14, %c0_15] : memref<2x2x768xf32, #tpu.memory_space<vmem>>, vector<1x2x768xf32>
    %22 = vector.shape_cast %21 : vector<1x2x768xf32> to vector<2x768xf32>
    %23 = vector.shape_cast %20 : vector<2x768xf32> to vector<1x2x768xf32>
    tpu.vector_store %arg4[%c1_13, %c0_14, %c0_15], %23 {strides = array<i32>} : memref<2x2x768xf32, #tpu.memory_space<vmem>>, vector<1x2x768xf32>,
    return
  }
  func.func @transform_0(%arg0: i32, %arg1: i32) -> (i32, i32, i32) {
    %c0_i32 = arith.constant 0 : i32
    %c0_i32_0 = arith.constant 0 : i32
    return %c0_i32, %arg1, %arg0 : i32, i32, i32
  }
  func.func @transform_1(%arg0: i32, %arg1: i32) -> (i32, i32, i32) {
    %c0_i32 = arith.constant 0 : i32
    %c0_i32_0 = arith.constant 0 : i32
    %c0_i32_1 = arith.constant 0 : i32
    return %c0_i32, %c0_i32_0, %arg0 : i32, i32, i32
  }
  func.func @transform_2(%arg0: i32, %arg1: i32) -> (i32, i32, i32) {
    %c0_i32 = arith.constant 0 : i32
    %c0_i32_0 = arith.constant 0 : i32
    return %c0_i32, %arg1, %arg0 : i32, i32, i32
  }
}

</mosaic_0001>

<llo_original>
// kernel: reverse.9
$region0: #{reverse.9}
  %s0 = inlined_call_operand.vmem [shape: f32[2,3,20,9], index: 0, kind: input, shape index: {}]
  %s1 = inlined_call_operand.vmem [shape: f32[2,3,20,9], index: 1, kind: output, shape index: {}]
  $region1: #{reverse.9} parent=0
    #allocation0 [shape = 'u8[73728]{0}', space=vmem, size = 0x12000, scoped, tag = 'operand span for operand 0']
    #allocation1 [shape = 'u8[49152]{0}', space=vmem, size = 0xc000, scoped, tag = 'operand span for operand 1']
    %s2 = scalar_lea.vmem [#allocation0], 8
    // Predicated region
    $region2: #{reverse.9} parent=1 // pred_check
      _
    $region3: #{reverse.9} parent=1 // pred_check_branch
      %4 = sbr.rel (0) target = $region5
    $region4: #{reverse.9} parent=1 // pred_region
      // Predicated region
      $region6: #{reverse.9} parent=4 // pred_check
        _
      $region7: #{reverse.9} parent=4 // pred_check_branch
        %6 = sbr.rel (0) target = $region9
      $region8: #{reverse.9} parent=4 // pred_region
        // Predicated region
        $region21: #{reverse.9} parent=8 // pred_check
          _
        $region22: #{reverse.9} parent=8 // pred_check_branch
          %43 = sbr.rel (0) target = $region24
        $region23: #{reverse.9} parent=8 // pred_region
          loop: start=0, step=1, limit=1
          $region25: #{reverse.9} parent=23 // loop_pre_header
            _
          $region26: #{reverse.9} parent=23 // loop_header
            %s45 = sphi 0, %s49
            %p46 = scmp.ge.s32.totalorder %s45, 1
            %s50 = sphi %s0, %s0
            %s51 = sphi %s2, %s2
          $region27: #{reverse.9} parent=23 // loop_header_branch
            %48 = sbr.rel (%p46) target = $region31
          $region28: #{reverse.9} parent=23 // loop_body
            %v52 = vld [vmem:[%s50] sm:$0xff]
            %53 = vst [vmem:[%s51] sm:$0xff] %v52
            %v54 = vld [vmem:[%s50 + $0x8] sm:$0xff]
            %55 = vst [vmem:[%s51 + $0x8] sm:$0xff] %v54
            %v56 = vld [vmem:[%s50 + $0x10] sm:$0xff]
            %57 = vst [vmem:[%s51 + $0x18] sm:$0xff] %v56
            %v58 = vld [vmem:[%s50 + $0x18] sm:$0xff]
            %59 = vst [vmem:[%s51 + $0x20] sm:$0xff] %v58
            %v60 = vld [vmem:[%s50 + $0x20] sm:$0xff]
            %61 = vst [vmem:[%s51 + $0x30] sm:$0xff] %v60
            %v62 = vld [vmem:[%s50 + $0x28] sm:$0xff]
            %63 = vst [vmem:[%s51 + $0x38] sm:$0xff] %v62
            %v64 = vld [vmem:[%s50 + $0x30] sm:$0xff]
            %65 = vst [vmem:[%s51 + $0x48] sm:$0xff] %v64
            %v66 = vld [vmem:[%s50 + $0x38] sm:$0xff]
            %67 = vst [vmem:[%s51 + $0x50] sm:$0xff] %v66
            %v68 = vld [vmem:[%s50 + $0x40] sm:$0xff]
            %69 = vst [vmem:[%s51 + $0x60] sm:$0xff] %v68
            %v70 = vld [vmem:[%s50 + $0x48] sm:$0xff]
            %71 = vst [vmem:[%s51 + $0x68] sm:$0xff] %v70
            %v72 = vld [vmem:[%s50 + $0x50] sm:$0xff]
            %73 = vst [vmem:[%s51 + $0x78] sm:$0xff] %v72
            %v74 = vld [vmem:[%s50 + $0x58] sm:$0xff]
            %75 = vst [vmem:[%s51 + $0x80] sm:$0xff] %v74
          $region29: #{reverse.9} parent=23 // loop_footer
            %s49 = sadd.s32 1, %s45
          $region30: #{reverse.9} parent=23 // loop_footer_branch
            %44 = sbr.rel target = $region26
          $region31: #{reverse.9} parent=23 // loop_exit
            _
        $region24: #{reverse.9} parent=8 // pred_fallthru
          _
        // Predicated region
        $region32: #{reverse.9} parent=8 // pred_check
          _
        $region33: #{reverse.9} parent=8 // pred_check_branch
          %77 = sbr.rel target = $region35
        $region34: #{reverse.9} parent=8 // pred_region
          _
        $region35: #{reverse.9} parent=8 // pred_fallthru
          _
      $region9: #{reverse.9} parent=4 // pred_fallthru
        _
      // Predicated region
      $region10: #{reverse.9} parent=4 // pred_check
        _
      $region11: #{reverse.9} parent=4 // pred_check_branch
        %8 = sbr.rel target = $region13
      $region12: #{reverse.9} parent=4 // pred_region
        loop: start=0, step=1, limit=1
        $region14: #{reverse.9} parent=12 // loop_pre_header
          _
        $region15: #{reverse.9} parent=12 // loop_header
          %s11 = sphi 0, %s15
          %p12 = scmp.ge.s32.totalorder %s11, 1
          %s16 = sphi %s0, %s0
          %s17 = sphi %s2, %s2
        $region16: #{reverse.9} parent=12 // loop_header_branch
          %14 = sbr.rel (%p12) target = $region20
        $region17: #{reverse.9} parent=12 // loop_body
          %v18 = vld [vmem:[%s16] sm:$0xff]
          %19 = vst [vmem:[%s17] sm:$0xff] %v18
          %v20 = vld [vmem:[%s16 + $0x8] sm:$0xff]
          %21 = vst [vmem:[%s17 + $0x8] sm:$0xff] %v20
          %v22 = vld [vmem:[%s16 + $0x10] sm:$0xff]
          %23 = vst [vmem:[%s17 + $0x18] sm:$0xff] %v22
          %v24 = vld [vmem:[%s16 + $0x18] sm:$0xff]
          %25 = vst [vmem:[%s17 + $0x20] sm:$0xff] %v24
          %v26 = vld [vmem:[%s16 + $0x20] sm:$0xff]
          %27 = vst [vmem:[%s17 + $0x30] sm:$0xff] %v26
          %v28 = vld [vmem:[%s16 + $0x28] sm:$0xff]
          %29 = vst [vmem:[%s17 + $0x38] sm:$0xff] %v28
          %v30 = vld [vmem:[%s16 + $0x30] sm:$0xff]
          %31 = vst [vmem:[%s17 + $0x48] sm:$0xff] %v30
          %v32 = vld [vmem:[%s16 + $0x38] sm:$0xff]
          %33 = vst [vmem:[%s17 + $0x50] sm:$0xff] %v32
          %v34 = vld [vmem:[%s16 + $0x40] sm:$0xff]
          %35 = vst [vmem:[%s17 + $0x60] sm:$0xff] %v34
          %v36 = vld [vmem:[%s16 + $0x48] sm:$0xff]
          %37 = vst [vmem:[%s17 + $0x68] sm:$0xff] %v36
          %v38 = vld [vmem:[%s16 + $0x50] sm:$0xff]
          %39 = vst [vmem:[%s17 + $0x78] sm:$0xff] %v38
          %v40 = vld [vmem:[%s16 + $0x58] sm:$0xff]
          %41 = vst [vmem:[%s17 + $0x80] sm:$0xff] %v40
        $region18: #{reverse.9} parent=12 // loop_footer
          %s15 = sadd.s32 1, %s11
        $region19: #{reverse.9} parent=12 // loop_footer_branch
          %10 = sbr.rel target = $region15
        $region20: #{reverse.9} parent=12 // loop_exit
          _
      $region13: #{reverse.9} parent=4 // pred_fallthru
        _
    $region5: #{reverse.9} parent=1 // pred_fallthru
      _
    %78 = vnop
    %s79 = scalar_lea.vmem [#allocation0], 8
    %s80 = scalar_lea.vmem %s79, 7 [#allocation0]
    %v81 = vld [vmem:[%s80] ss:$-1 sm:$0xff]
    %v82 = vrot.slane %v81, 7
    %83 = vst [vmem:[#allocation1] sm:$0xff] %v82
    %s84 = scalar_lea.vmem [#allocation0], 16
    %s85 = scalar_lea.vmem %s84, 7 [#allocation0]
    %v86 = vld [vmem:[%s85] ss:$-1 sm:$0xff]
    %v87 = vrot.slane %v86, 7
    %v88 = vlaneseq
    %v89 = vshrl.u32 %v88, 7
    %vm90 = vcmp.lt.s32.totalorder %v89, 1
    %91 = vst.msk [vmem:[#allocation1] sm:$0xff] %vm90, %v87
    %s92 = scalar_lea.vmem [#allocation1], 8
    %s93 = scalar_lea.vmem [#allocation0], 7
    %v94 = vld [vmem:[%s93] ss:$-1 sm:$0xff]
    %v95 = vrot.slane %v94, 7
    %96 = vst [vmem:[%s92] sm:$0xff] %v95
    %s97 = scalar_lea.vmem [#allocation0], 8
    %s98 = scalar_lea.vmem %s97, 7 [#allocation0]
    %v99 = vld [vmem:[%s98] ss:$-1 sm:$0xff]
    %v100 = vrot.slane %v99, 7
    %v101 = vlaneseq
    %v102 = vshrl.u32 %v101, 7
    %vm103 = vcmp.lt.s32.totalorder %v102, 1
    %104 = vst.msk [vmem:[%s92] sm:$0xff] %vm103, %v100
    %s105 = scalar_lea.vmem [#allocation1], 16
    %s106 = scalar_lea.vmem [#allocation0], 24
    %s107 = scalar_lea.vmem %s106, 8 [#allocation0]
    %s108 = scalar_lea.vmem %s107, 7 [#allocation0]
    %v109 = vld [vmem:[%s108] ss:$-1 sm:$0xff]
    %v110 = vrot.slane %v109, 7
    %111 = vst [vmem:[%s105] sm:$0xff] %v110
    %s112 = scalar_lea.vmem %s106, 16 [#allocation0]
    %s113 = scalar_lea.vmem %s112, 7 [#allocation0]
    %v114 = vld [vmem:[%s113] ss:$-1 sm:$0xff]
    %v115 = vrot.slane %v114, 7
    %v116 = vlaneseq
    %v117 = vshrl.u32 %v116, 7
    %vm118 = vcmp.lt.s32.totalorder %v117, 1
    %119 = vst.msk [vmem:[%s105] sm:$0xff] %vm118, %v115
    %s120 = scalar_lea.vmem %s105, 8 [#allocation1]
    %s121 = scalar_lea.vmem %s106, 7 [#allocation0]
    %v122 = vld [vmem:[%s121] ss:$-1 sm:$0xff]
    %v123 = vrot.slane %v122, 7
    %124 = vst [vmem:[%s120] sm:$0xff] %v123
    %s125 = scalar_lea.vmem %s106, 8 [#allocation0]
    %s126 = scalar_lea.vmem %s125, 7 [#allocation0]
    %v127 = vld [vmem:[%s126] ss:$-1 sm:$0xff]
    %v128 = vrot.slane %v127, 7
    %v129 = vlaneseq
    %v130 = vshrl.u32 %v129, 7
    %vm131 = vcmp.lt.s32.totalorder %v130, 1
    %132 = vst.msk [vmem:[%s120] sm:$0xff] %vm131, %v128
    %s133 = scalar_lea.vmem [#allocation1], 32
    %s134 = scalar_lea.vmem [#allocation0], 48
    %s135 = scalar_lea.vmem %s134, 8 [#allocation0]
    %s136 = scalar_lea.vmem %s135, 7 [#allocation0]
    %v137 = vld [vmem:[%s136] ss:$-1 sm:$0xff]
    %v138 = vrot.slane %v137, 7
    %139 = vst [vmem:[%s133] sm:$0xff] %v138
    %s140 = scalar_lea.vmem %s134, 16 [#allocation0]
    %s141 = scalar_lea.vmem %s140, 7 [#allocation0]
    %v142 = vld [vmem:[%s141] ss:$-1 sm:$0xff]
    %v143 = vrot.slane %v142, 7
    %v144 = vlaneseq
    %v145 = vshrl.u32 %v144, 7
    %vm146 = vcmp.lt.s32.totalorder %v145, 1
    %147 = vst.msk [vmem:[%s133] sm:$0xff] %vm146, %v143
    %s148 = scalar_lea.vmem %s133, 8 [#allocation1]
    %s149 = scalar_lea.vmem %s134, 7 [#allocation0]
    %v150 = vld [vmem:[%s149] ss:$-1 sm:$0xff]
    %v151 = vrot.slane %v150, 7
    %152 = vst [vmem:[%s148] sm:$0xff] %v151
    %s153 = scalar_lea.vmem %s134, 8 [#allocation0]
    %s154 = scalar_lea.vmem %s153, 7 [#allocation0]
    %v155 = vld [vmem:[%s154] ss:$-1 sm:$0xff]
    %v156 = vrot.slane %v155, 7
    %v157 = vlaneseq
    %v158 = vshrl.u32 %v157, 7
    %vm159 = vcmp.lt.s32.totalorder %v158, 1
    %160 = vst.msk [vmem:[%s148] sm:$0xff] %vm159, %v156
    %s161 = scalar_lea.vmem [#allocation1], 48
    %s162 = scalar_lea.vmem [#allocation0], 72
    %s163 = scalar_lea.vmem %s162, 8 [#allocation0]
    %s164 = scalar_lea.vmem %s163, 7 [#allocation0]
    %v165 = vld [vmem:[%s164] ss:$-1 sm:$0xff]
    %v166 = vrot.slane %v165, 7
    %167 = vst [vmem:[%s161] sm:$0xff] %v166
    %s168 = scalar_lea.vmem %s162, 16 [#allocation0]
    %s169 = scalar_lea.vmem %s168, 7 [#allocation0]
    %v170 = vld [vmem:[%s169] ss:$-1 sm:$0xff]
    %v171 = vrot.slane %v170, 7
    %v172 = vlaneseq
    %v173 = vshrl.u32 %v172, 7
    %vm174 = vcmp.lt.s32.totalorder %v173, 1
    %175 = vst.msk [vmem:[%s161] sm:$0xff] %vm174, %v171
    %s176 = scalar_lea.vmem %s161, 8 [#allocation1]
    %s177 = scalar_lea.vmem %s162, 7 [#allocation0]
    %v178 = vld [vmem:[%s177] ss:$-1 sm:$0xff]
    %v179 = vrot.slane %v178, 7
    %180 = vst [vmem:[%s176] sm:$0xff] %v179
    %s181 = scalar_lea.vmem %s162, 8 [#allocation0]
    %s182 = scalar_lea.vmem %s181, 7 [#allocation0]
    %v183 = vld [vmem:[%s182] ss:$-1 sm:$0xff]
    %v184 = vrot.slane %v183, 7
    %v185 = vlaneseq
    %v186 = vshrl.u32 %v185, 7
    %vm187 = vcmp.lt.s32.totalorder %v186, 1
    %188 = vst.msk [vmem:[%s176] sm:$0xff] %vm187, %v184
    %s189 = scalar_lea.vmem [#allocation1], 64
    %s190 = scalar_lea.vmem [#allocation0], 96
    %s191 = scalar_lea.vmem %s190, 8 [#allocation0]
    %s192 = scalar_lea.vmem %s191, 7 [#allocation0]
    %v193 = vld [vmem:[%s192] ss:$-1 sm:$0xff]
    %v194 = vrot.slane %v193, 7
    %195 = vst [vmem:[%s189] sm:$0xff] %v194
    %s196 = scalar_lea.vmem %s190, 16 [#allocation0]
    %s197 = scalar_lea.vmem %s196, 7 [#allocation0]
    %v198 = vld [vmem:[%s197] ss:$-1 sm:$0xff]
    %v199 = vrot.slane %v198, 7
    %v200 = vlaneseq
    %v201 = vshrl.u32 %v200, 7
    %vm202 = vcmp.lt.s32.totalorder %v201, 1
    %203 = vst.msk [vmem:[%s189] sm:$0xff] %vm202, %v199
    %s204 = scalar_lea.vmem %s189, 8 [#allocation1]
    %s205 = scalar_lea.vmem %s190, 7 [#allocation0]
    %v206 = vld [vmem:[%s205] ss:$-1 sm:$0xff]
    %v207 = vrot.slane %v206, 7
    %208 = vst [vmem:[%s204] sm:$0xff] %v207
    %s209 = scalar_lea.vmem %s190, 8 [#allocation0]
    %s210 = scalar_lea.vmem %s209, 7 [#allocation0]
    %v211 = vld [vmem:[%s210] ss:$-1 sm:$0xff]
    %v212 = vrot.slane %v211, 7
    %v213 = vlaneseq
    %v214 = vshrl.u32 %v213, 7
    %vm215 = vcmp.lt.s32.totalorder %v214, 1
    %216 = vst.msk [vmem:[%s204] sm:$0xff] %vm215, %v212
    %s217 = scalar_lea.vmem [#allocation1], 80
    %s218 = scalar_lea.vmem [#allocation0], 120
    %s219 = scalar_lea.vmem %s218, 8 [#allocation0]
    %s220 = scalar_lea.vmem %s219, 7 [#allocation0]
    %v221 = vld [vmem:[%s220] ss:$-1 sm:$0xff]
    %v222 = vrot.slane %v221, 7
    %223 = vst [vmem:[%s217] sm:$0xff] %v222
    %s224 = scalar_lea.vmem %s218, 16 [#allocation0]
    %s225 = scalar_lea.vmem %s224, 7 [#allocation0]
    %v226 = vld [vmem:[%s225] ss:$-1 sm:$0xff]
    %v227 = vrot.slane %v226, 7
    %v228 = vlaneseq
    %v229 = vshrl.u32 %v228, 7
    %vm230 = vcmp.lt.s32.totalorder %v229, 1
    %231 = vst.msk [vmem:[%s217] sm:$0xff] %vm230, %v227
    %s232 = scalar_lea.vmem %s217, 8 [#allocation1]
    %s233 = scalar_lea.vmem %s218, 7 [#allocation0]
    %v234 = vld [vmem:[%s233] ss:$-1 sm:$0xff]
    %v235 = vrot.slane %v234, 7
    %236 = vst [vmem:[%s232] sm:$0xff] %v235
    %s237 = scalar_lea.vmem %s218, 8 [#allocation0]
    %s238 = scalar_lea.vmem %s237, 7 [#allocation0]
    %v239 = vld [vmem:[%s238] ss:$-1 sm:$0xff]
    %v240 = vrot.slane %v239, 7
    %v241 = vlaneseq
    %v242 = vshrl.u32 %v241, 7
    %vm243 = vcmp.lt.s32.totalorder %v242, 1
    %244 = vst.msk [vmem:[%s232] sm:$0xff] %vm243, %v240
    // Predicated region
    $region36: #{reverse.9} parent=1 // pred_check
      _
    $region37: #{reverse.9} parent=1 // pred_check_branch
      %246 = sbr.rel (0) target = $region39
    $region38: #{reverse.9} parent=1 // pred_region
      // Predicated region
      $region40: #{reverse.9} parent=38 // pred_check
        _
      $region41: #{reverse.9} parent=38 // pred_check_branch
        %248 = sbr.rel (0) target = $region43
      $region42: #{reverse.9} parent=38 // pred_region
        // Predicated region
        $region55: #{reverse.9} parent=42 // pred_check
          _
        $region56: #{reverse.9} parent=42 // pred_check_branch
          %285 = sbr.rel (0) target = $region58
        $region57: #{reverse.9} parent=42 // pred_region
          loop: start=0, step=1, limit=1
          $region59: #{reverse.9} parent=57 // loop_pre_header
            _
          $region60: #{reverse.9} parent=57 // loop_header
            %s287 = sphi 0, %s291
            %p288 = scmp.ge.s32.totalorder %s287, 1
            %s292 = sphi [#allocation1], [#allocation1]
            %s293 = sphi %s1, %s1
          $region61: #{reverse.9} parent=57 // loop_header_branch
            %290 = sbr.rel (%p288) target = $region65
          $region62: #{reverse.9} parent=57 // loop_body
            %v294 = vld [vmem:[%s292] sm:$0xff]
            %295 = vst [vmem:[%s293] sm:$0xff] %v294
            %v296 = vld [vmem:[%s292 + $0x8] sm:$0xff]
            %297 = vst [vmem:[%s293 + $0x8] sm:$0xff] %v296
            %v298 = vld [vmem:[%s292 + $0x10] sm:$0xff]
            %299 = vst [vmem:[%s293 + $0x10] sm:$0xff] %v298
            %v300 = vld [vmem:[%s292 + $0x18] sm:$0xff]
            %301 = vst [vmem:[%s293 + $0x18] sm:$0xff] %v300
            %v302 = vld [vmem:[%s292 + $0x20] sm:$0xff]
            %303 = vst [vmem:[%s293 + $0x20] sm:$0xff] %v302
            %v304 = vld [vmem:[%s292 + $0x28] sm:$0xff]
            %305 = vst [vmem:[%s293 + $0x28] sm:$0xff] %v304
            %v306 = vld [vmem:[%s292 + $0x30] sm:$0xff]
            %307 = vst [vmem:[%s293 + $0x30] sm:$0xff] %v306
            %v308 = vld [vmem:[%s292 + $0x38] sm:$0xff]
            %309 = vst [vmem:[%s293 + $0x38] sm:$0xff] %v308
            %v310 = vld [vmem:[%s292 + $0x40] sm:$0xff]
            %311 = vst [vmem:[%s293 + $0x40] sm:$0xff] %v310
            %v312 = vld [vmem:[%s292 + $0x48] sm:$0xff]
            %313 = vst [vmem:[%s293 + $0x48] sm:$0xff] %v312
            %v314 = vld [vmem:[%s292 + $0x50] sm:$0xff]
            %315 = vst [vmem:[%s293 + $0x50] sm:$0xff] %v314
            %v316 = vld [vmem:[%s292 + $0x58] sm:$0xff]
            %317 = vst [vmem:[%s293 + $0x58] sm:$0xff] %v316
          $region63: #{reverse.9} parent=57 // loop_footer
            %s291 = sadd.s32 1, %s287
          $region64: #{reverse.9} parent=57 // loop_footer_branch
            %286 = sbr.rel target = $region60
          $region65: #{reverse.9} parent=57 // loop_exit
            _
        $region58: #{reverse.9} parent=42 // pred_fallthru
          _
        // Predicated region
        $region66: #{reverse.9} parent=42 // pred_check
          _
        $region67: #{reverse.9} parent=42 // pred_check_branch
          %319 = sbr.rel target = $region69
        $region68: #{reverse.9} parent=42 // pred_region
          _
        $region69: #{reverse.9} parent=42 // pred_fallthru
          _
      $region43: #{reverse.9} parent=38 // pred_fallthru
        _
      // Predicated region
      $region44: #{reverse.9} parent=38 // pred_check
        _
      $region45: #{reverse.9} parent=38 // pred_check_branch
        %250 = sbr.rel target = $region47
      $region46: #{reverse.9} parent=38 // pred_region
        loop: start=0, step=1, limit=1
        $region48: #{reverse.9} parent=46 // loop_pre_header
          _
        $region49: #{reverse.9} parent=46 // loop_header
          %s253 = sphi 0, %s257
          %p254 = scmp.ge.s32.totalorder %s253, 1
          %s258 = sphi [#allocation1], [#allocation1]
          %s259 = sphi %s1, %s1
        $region50: #{reverse.9} parent=46 // loop_header_branch
          %256 = sbr.rel (%p254) target = $region54
        $region51: #{reverse.9} parent=46 // loop_body
          %v260 = vld [vmem:[%s258] sm:$0xff]
          %261 = vst [vmem:[%s259] sm:$0xff] %v260
          %v262 = vld [vmem:[%s258 + $0x8] sm:$0xff]
          %263 = vst [vmem:[%s259 + $0x8] sm:$0xff] %v262
          %v264 = vld [vmem:[%s258 + $0x10] sm:$0xff]
          %265 = vst [vmem:[%s259 + $0x10] sm:$0xff] %v264
          %v266 = vld [vmem:[%s258 + $0x18] sm:$0xff]
          %267 = vst [vmem:[%s259 + $0x18] sm:$0xff] %v266
          %v268 = vld [vmem:[%s258 + $0x20] sm:$0xff]
          %269 = vst [vmem:[%s259 + $0x20] sm:$0xff] %v268
          %v270 = vld [vmem:[%s258 + $0x28] sm:$0xff]
          %271 = vst [vmem:[%s259 + $0x28] sm:$0xff] %v270
          %v272 = vld [vmem:[%s258 + $0x30] sm:$0xff]
          %273 = vst [vmem:[%s259 + $0x30] sm:$0xff] %v272
          %v274 = vld [vmem:[%s258 + $0x38] sm:$0xff]
          %275 = vst [vmem:[%s259 + $0x38] sm:$0xff] %v274
          %v276 = vld [vmem:[%s258 + $0x40] sm:$0xff]
          %277 = vst [vmem:[%s259 + $0x40] sm:$0xff] %v276
          %v278 = vld [vmem:[%s258 + $0x48] sm:$0xff]
          %279 = vst [vmem:[%s259 + $0x48] sm:$0xff] %v278
          %v280 = vld [vmem:[%s258 + $0x50] sm:$0xff]
          %281 = vst [vmem:[%s259 + $0x50] sm:$0xff] %v280
          %v282 = vld [vmem:[%s258 + $0x58] sm:$0xff]
          %283 = vst [vmem:[%s259 + $0x58] sm:$0xff] %v282
        $region52: #{reverse.9} parent=46 // loop_footer
          %s257 = sadd.s32 1, %s253
        $region53: #{reverse.9} parent=46 // loop_footer_branch
          %252 = sbr.rel target = $region49
        $region54: #{reverse.9} parent=46 // loop_exit
          _
      $region47: #{reverse.9} parent=38 // pred_fallthru
        _
    $region39: #{reverse.9} parent=1 // pred_fallthru
      _
    %320 = vnop

// kernel: squeeze.2
$region0: #{squeeze.2}
  %s0 = inlined_call_operand.vmem [shape: f32[1,2,660], index: 0, kind: input, shape index: {}]
  %s1 = inlined_call_operand.vmem [shape: f32[2,3,20,11], index: 1, kind: output, shape index: {}]
  $region1: #{squeeze.2} parent=0
    #allocation0 [shape = 'u8[24576]{0}', space=vmem, size = 0x6000, scoped, tag = 'scoped mem for input reshape']
    %s3 = sshllo.u32 0, 2
    %s4 = smul.addr 2, 5
    %s5 = scalar_lea.vmem %s0, %s4
    %v6 = vld [vmem:[%s5] sm:%s3]
    %s7 = scalar_lea.vmem [#allocation0], 40
    %8 = vst [vmem:[%s7] sm:%s3] %v6
    %s9 = smul.addr 2, 4
    %s10 = scalar_lea.vmem %s0, %s9
    %v11 = vld [vmem:[%s10] sm:%s3]
    %s12 = scalar_lea.vmem [#allocation0], 32
    %13 = vst [vmem:[%s12] sm:%s3] %v11
    %s14 = smul.addr 2, 3
    %s15 = scalar_lea.vmem %s0, %s14
    %v16 = vld [vmem:[%s15] sm:%s3]
    %s17 = scalar_lea.vmem [#allocation0], 24
    %18 = vst [vmem:[%s17] sm:%s3] %v16
    %s19 = smul.addr 2, 2
    %s20 = scalar_lea.vmem %s0, %s19
    %v21 = vld [vmem:[%s20] sm:%s3]
    %s22 = scalar_lea.vmem [#allocation0], 16
    %23 = vst [vmem:[%s22] sm:%s3] %v21
    %s24 = scalar_lea.vmem %s0, 2
    %v25 = vld [vmem:[%s24] sm:%s3]
    %s26 = scalar_lea.vmem [#allocation0], 8
    %27 = vst [vmem:[%s26] sm:%s3] %v25
    %v28 = vld [vmem:[%s0] sm:%s3]
    %29 = vst [vmem:[#allocation0] sm:%s3] %v28
    %v30 = vld [vmem:[#allocation0] sm:$0x3]
    %vm31 = vcmask 89088
    %32 = vst.msk [vmem:[%s1] ss:$72 sm:$0x3] %vm31, %v30
    %s33 = scalar_lea.vmem [#allocation0], 24
    %v34 = vld [vmem:[%s33] sm:$0x3]
    %35 = vrot.lane.b32.xlu0 %v34, 127
    %v36 = vpop.permute.xlu0 %35
    %vm37 = vcmask 89088
    %s38 = scalar_lea.vmem %s1, 39
    %39 = vst.msk [vmem:[%s38] ss:$72 sm:$0x3] %vm37, %v36
    %s40 = scalar_lea.vmem [#allocation0], 8
    %v41 = vld [vmem:[%s40] sm:$0x3]
    %42 = vrot.lane.b32.xlu0 %v41, 124
    %v43 = vpop.permute.xlu0 %42
    %vm44 = vcmask 89088
    %s45 = scalar_lea.vmem %s1, 12
    %46 = vst.msk [vmem:[%s45] ss:$72 sm:$0x3] %vm44, %v43
    %s47 = scalar_lea.vmem [#allocation0], 32
    %v48 = vld [vmem:[%s47] sm:$0x3]
    %49 = vrot.lane.b32.xlu0 %v48, 123
    %v50 = vpop.permute.xlu0 %49
    %vm51 = vcmask 89088
    %s52 = scalar_lea.vmem %s1, 55
    %53 = vst.msk [vmem:[%s52] ss:$72 sm:$0x3] %vm51, %v50
    %s54 = scalar_lea.vmem [#allocation0], 17
    %s55 = smov 3
    %v56 = vld [vmem:[%s54] ss:$-1 sm:%s55]
    %57 = vrot.lane.b32.xlu0 %v56, 120
    %v58 = vpop.permute.xlu0 %57
    %vm59 = vcmask 89088
    %s60 = scalar_lea.vmem %s1, 100
    %61 = vst.msk [vmem:[%s60] ss:$-72 sm:$0x3] %vm59, %v58
    %s62 = scalar_lea.vmem [#allocation0], 40
    %v63 = vld [vmem:[%s62] sm:$0x3]
    %64 = vrot.lane.b32.xlu0 %v63, 119
    %v65 = vpop.permute.xlu0 %64
    %vm66 = vcmask 89088
    %s67 = scalar_lea.vmem %s1, 67
    %68 = vst.msk [vmem:[%s67] ss:$72 sm:$0x3] %vm66, %v65
    %v69 = vld [vmem:[#allocation0] sm:$0x3]
    %70 = vrot.lane.b32.xlu0 %v69, 117
    %v71 = vpop.permute.xlu0 %70
    %vm72 = vcmask 89088
    %s73 = scalar_lea.vmem %s1, 1
    %74 = vst.msk [vmem:[%s73] ss:$72 sm:$0x3] %vm72, %v71
    %s75 = scalar_lea.vmem [#allocation0], 24
    %v76 = vld [vmem:[%s75] sm:$0x3]
    %77 = vrot.lane.b32.xlu0 %v76, 116
    %v78 = vpop.permute.xlu0 %77
    %vm79 = vcmask 89088
    %s80 = scalar_lea.vmem %s1, 40
    %81 = vst.msk [vmem:[%s80] ss:$72 sm:$0x3] %vm79, %v78
    %s82 = scalar_lea.vmem [#allocation0], 8
    %v83 = vld [vmem:[%s82] sm:$0x3]
    %84 = vrot.lane.b32.xlu0 %v83, 113
    %v85 = vpop.permute.xlu0 %84
    %vm86 = vcmask 89088
    %s87 = scalar_lea.vmem %s1, 13
    %88 = vst.msk [vmem:[%s87] ss:$72 sm:$0x3] %vm86, %v85
    %s89 = scalar_lea.vmem [#allocation0], 33
    %s90 = smov 3
    %v91 = vld [vmem:[%s89] ss:$-1 sm:%s90]
    %92 = vrot.lane.b32.xlu0 %v91, 112
    %v93 = vpop.permute.xlu0 %92
    %vm94 = vcmask 89088
    %s95 = scalar_lea.vmem %s1, 128
    %96 = vst.msk [vmem:[%s95] ss:$-72 sm:$0x3] %vm94, %v93
    %s97 = scalar_lea.vmem [#allocation0], 17
    %s98 = smov 3
    %v99 = vld [vmem:[%s97] ss:$-1 sm:%s98]
    %100 = vrot.lane.b32.xlu0 %v99, 109
    %v101 = vpop.permute.xlu0 %100
    %vm102 = vcmask 89088
    %s103 = scalar_lea.vmem %s1, 101
    %104 = vst.msk [vmem:[%s103] ss:$-72 sm:$0x3] %vm102, %v101
    %v105 = vld [vmem:[#allocation0] sm:$0x3]
    %106 = vrot.lane.b32.xlu0 %v105, 106
    %v107 = vpop.permute.xlu0 %106
    %vm108 = vcmask 89088
    %s109 = scalar_lea.vmem %s1, 2
    %110 = vst.msk [vmem:[%s109] ss:$72 sm:$0x3] %vm108, %v107
    %s111 = scalar_lea.vmem [#allocation0], 24
    %v112 = vld [vmem:[%s111] sm:$0x3]
    %113 = vrot.lane.b32.xlu0 %v112, 105
    %v114 = vpop.permute.xlu0 %113
    %vm115 = vcmask 89088
    %s116 = scalar_lea.vmem %s1, 41
    %117 = vst.msk [vmem:[%s116] ss:$72 sm:$0x3] %vm115, %v114
    %s118 = scalar_lea.vmem [#allocation0], 8
    %v119 = vld [vmem:[%s118] sm:$0x3]
    %120 = vrot.lane.b32.xlu0 %v119, 102
    %v121 = vpop.permute.xlu0 %120
    %vm122 = vcmask 89088
    %s123 = scalar_lea.vmem %s1, 14
    %124 = vst.msk [vmem:[%s123] ss:$72 sm:$0x3] %vm122, %v121
    %s125 = scalar_lea.vmem [#allocation0], 33
    %s126 = smov 3
    %v127 = vld [vmem:[%s125] ss:$-1 sm:%s126]
    %128 = vrot.lane.b32.xlu0 %v127, 101
    %v129 = vpop.permute.xlu0 %128
    %vm130 = vcmask 89088
    %s131 = scalar_lea.vmem %s1, 129
    %132 = vst.msk [vmem:[%s131] ss:$-72 sm:$0x3] %vm130, %v129
    %s133 = scalar_lea.vmem [#allocation0], 17
    %s134 = smov 3
    %v135 = vld [vmem:[%s133] ss:$-1 sm:%s134]
    %136 = vrot.lane.b32.xlu0 %v135, 98
    %v137 = vpop.permute.xlu0 %136
    %vm138 = vcmask 89088
    %s139 = scalar_lea.vmem %s1, 102
    %140 = vst.msk [vmem:[%s139] ss:$-72 sm:$0x3] %vm138, %v137
    %v141 = vld [vmem:[#allocation0] sm:$0x3]
    %142 = vrot.lane.b32.xlu0 %v141, 95
    %v143 = vpop.permute.xlu0 %142
    %vm144 = vcmask 89088
    %s145 = scalar_lea.vmem %s1, 3
    %146 = vst.msk [vmem:[%s145] ss:$72 sm:$0x3] %vm144, %v143
    %s147 = scalar_lea.vmem [#allocation0], 24
    %v148 = vld [vmem:[%s147] sm:$0x3]
    %149 = vrot.lane.b32.xlu0 %v148, 94
    %v150 = vpop.permute.xlu0 %149
    %vm151 = vcmask 89088
    %s152 = scalar_lea.vmem %s1, 42
    %153 = vst.msk [vmem:[%s152] ss:$72 sm:$0x3] %vm151, %v150
    %s154 = scalar_lea.vmem [#allocation0], 8
    %v155 = vld [vmem:[%s154] sm:$0x3]
    %156 = vrot.lane.b32.xlu0 %v155, 91
    %v157 = vpop.permute.xlu0 %156
    %vm158 = vcmask 89088
    %s159 = scalar_lea.vmem %s1, 15
    %160 = vst.msk [vmem:[%s159] ss:$72 sm:$0x3] %vm158, %v157
    %s161 = scalar_lea.vmem [#allocation0], 33
    %s162 = smov 3
    %v163 = vld [vmem:[%s161] ss:$-1 sm:%s162]
    %164 = vrot.lane.b32.xlu0 %v163, 90
    %v165 = vpop.permute.xlu0 %164
    %vm166 = vcmask 89088
    %s167 = scalar_lea.vmem %s1, 130
    %168 = vst.msk [vmem:[%s167] ss:$-72 sm:$0x3] %vm166, %v165
    %s169 = scalar_lea.vmem [#allocation0], 17
    %s170 = smov 3
    %v171 = vld [vmem:[%s169] ss:$-1 sm:%s170]
    %172 = vrot.lane.b32.xlu0 %v171, 87
    %v173 = vpop.permute.xlu0 %172
    %vm174 = vcmask 89088
    %s175 = scalar_lea.vmem %s1, 103
    %176 = vst.msk [vmem:[%s175] ss:$-72 sm:$0x3] %vm174, %v173
    %v177 = vld [vmem:[#allocation0] sm:$0x3]
    %178 = vrot.lane.b32.xlu0 %v177, 84
    %v179 = vpop.permute.xlu0 %178
    %vm180 = vcmask 89088
    %s181 = scalar_lea.vmem %s1, 4
    %182 = vst.msk [vmem:[%s181] ss:$72 sm:$0x3] %vm180, %v179
    %s183 = scalar_lea.vmem [#allocation0], 24
    %v184 = vld [vmem:[%s183] sm:$0x3]
    %185 = vrot.lane.b32.xlu0 %v184, 83
    %v186 = vpop.permute.xlu0 %185
    %vm187 = vcmask 89088
    %s188 = scalar_lea.vmem %s1, 43
    %189 = vst.msk [vmem:[%s188] ss:$72 sm:$0x3] %vm187, %v186
    %s190 = scalar_lea.vmem [#allocation0], 8
    %v191 = vld [vmem:[%s190] sm:$0x3]
    %192 = vrot.lane.b32.xlu0 %v191, 80
    %v193 = vpop.permute.xlu0 %192
    %vm194 = vcmask 89088
    %s195 = scalar_lea.vmem %s1, 16
    %196 = vst.msk [vmem:[%s195] ss:$72 sm:$0x3] %vm194, %v193
    %s197 = scalar_lea.vmem [#allocation0], 33
    %s198 = smov 3
    %v199 = vld [vmem:[%s197] ss:$-1 sm:%s198]
    %200 = vrot.lane.b32.xlu0 %v199, 79
    %v201 = vpop.permute.xlu0 %200
    %vm202 = vcmask 89088
    %s203 = scalar_lea.vmem %s1, 131
    %204 = vst.msk [vmem:[%s203] ss:$-72 sm:$0x3] %vm202, %v201
    %s205 = scalar_lea.vmem [#allocation0], 16
    %v206 = vld [vmem:[%s205] sm:$0x3]
    %207 = vrot.lane.b32.xlu0 %v206, 76
    %v208 = vpop.permute.xlu0 %207
    %vm209 = vcmask 89088
    %s210 = scalar_lea.vmem %s1, 32
    %211 = vst.msk [vmem:[%s210] ss:$72 sm:$0x3] %vm209, %v208
    %v212 = vld [vmem:[#allocation0] sm:$0x3]
    %213 = vrot.lane.b32.xlu0 %v212, 73
    %v214 = vpop.permute.xlu0 %213
    %vm215 = vcmask 89088
    %s216 = scalar_lea.vmem %s1, 5
    %217 = vst.msk [vmem:[%s216] ss:$72 sm:$0x3] %vm215, %v214
    %s218 = scalar_lea.vmem [#allocation0], 24
    %v219 = vld [vmem:[%s218] sm:$0x3]
    %220 = vrot.lane.b32.xlu0 %v219, 72
    %v221 = vpop.permute.xlu0 %220
    %vm222 = vcmask 89088
    %s223 = scalar_lea.vmem %s1, 48
    %224 = vst.msk [vmem:[%s223] ss:$72 sm:$0x3] %vm222, %v221
    %s225 = scalar_lea.vmem [#allocation0], 8
    %v226 = vld [vmem:[%s225] sm:$0x3]
    %227 = vrot.lane.b32.xlu0 %v226, 69
    %v228 = vpop.permute.xlu0 %227
    %vm229 = vcmask 89088
    %s230 = scalar_lea.vmem %s1, 17
    %231 = vst.msk [vmem:[%s230] ss:$72 sm:$0x3] %vm229, %v228
    %s232 = scalar_lea.vmem [#allocation0], 33
    %s233 = smov 3
    %v234 = vld [vmem:[%s232] ss:$-1 sm:%s233]
    %235 = vrot.lane.b32.xlu0 %v234, 68
    %v236 = vpop.permute.xlu0 %235
    %vm237 = vcmask 89088
    %s238 = scalar_lea.vmem %s1, 132
    %239 = vst.msk [vmem:[%s238] ss:$-72 sm:$0x3] %vm237, %v236
    %s240 = scalar_lea.vmem [#allocation0], 16
    %v241 = vld [vmem:[%s240] sm:$0x3]
    %242 = vrot.lane.b32.xlu0 %v241, 65
    %v243 = vpop.permute.xlu0 %242
    %vm244 = vcmask 89088
    %s245 = scalar_lea.vmem %s1, 33
    %246 = vst.msk [vmem:[%s245] ss:$72 sm:$0x3] %vm244, %v243
    %v247 = vld [vmem:[#allocation0] sm:$0x3]
    %248 = vrot.lane.b32.xlu0 %v247, 62
    %v249 = vpop.permute.xlu0 %248
    %vm250 = vcmask 89088
    %s251 = scalar_lea.vmem %s1, 6
    %252 = vst.msk [vmem:[%s251] ss:$72 sm:$0x3] %vm250, %v249
    %s253 = scalar_lea.vmem [#allocation0], 24
    %v254 = vld [vmem:[%s253] sm:$0x3]
    %255 = vrot.lane.b32.xlu0 %v254, 61
    %v256 = vpop.permute.xlu0 %255
    %vm257 = vcmask 89088
    %s258 = scalar_lea.vmem %s1, 49
    %259 = vst.msk [vmem:[%s258] ss:$72 sm:$0x3] %vm257, %v256
    %s260 = scalar_lea.vmem [#allocation0], 8
    %v261 = vld [vmem:[%s260] sm:$0x3]
    %262 = vrot.lane.b32.xlu0 %v261, 58
    %v263 = vpop.permute.xlu0 %262
    %vm264 = vcmask 89088
    %s265 = scalar_lea.vmem %s1, 18
    %266 = vst.msk [vmem:[%s265] ss:$72 sm:$0x3] %vm264, %v263
    %s267 = scalar_lea.vmem [#allocation0], 33
    %s268 = smov 3
    %v269 = vld [vmem:[%s267] ss:$-1 sm:%s268]
    %270 = vrot.lane.b32.xlu0 %v269, 57
    %v271 = vpop.permute.xlu0 %270
    %vm272 = vcmask 89088
    %s273 = scalar_lea.vmem %s1, 133
    %274 = vst.msk [vmem:[%s273] ss:$-72 sm:$0x3] %vm272, %v271
    %s275 = scalar_lea.vmem [#allocation0], 16
    %v276 = vld [vmem:[%s275] sm:$0x3]
    %277 = vrot.lane.b32.xlu0 %v276, 54
    %v278 = vpop.permute.xlu0 %277
    %vm279 = vcmask 89088
    %s280 = scalar_lea.vmem %s1, 34
    %281 = vst.msk [vmem:[%s280] ss:$72 sm:$0x3] %vm279, %v278
    %v282 = vld [vmem:[#allocation0] sm:$0x3]
    %283 = vrot.lane.b32.xlu0 %v282, 51
    %v284 = vpop.permute.xlu0 %283
    %vm285 = vcmask 89088
    %s286 = scalar_lea.vmem %s1, 7
    %287 = vst.msk [vmem:[%s286] ss:$72 sm:$0x3] %vm285, %v284
    %s288 = scalar_lea.vmem [#allocation0], 24
    %v289 = vld [vmem:[%s288] sm:$0x3]
    %290 = vrot.lane.b32.xlu0 %v289, 50
    %v291 = vpop.permute.xlu0 %290
    %vm292 = vcmask 89088
    %s293 = scalar_lea.vmem %s1, 50
    %294 = vst.msk [vmem:[%s293] ss:$72 sm:$0x3] %vm292, %v291
    %s295 = scalar_lea.vmem [#allocation0], 8
    %v296 = vld [vmem:[%s295] sm:$0x3]
    %297 = vrot.lane.b32.xlu0 %v296, 47
    %v298 = vpop.permute.xlu0 %297
    %vm299 = vcmask 89088
    %s300 = scalar_lea.vmem %s1, 19
    %301 = vst.msk [vmem:[%s300] ss:$72 sm:$0x3] %vm299, %v298
    %s302 = scalar_lea.vmem [#allocation0], 33
    %s303 = smov 3
    %v304 = vld [vmem:[%s302] ss:$-1 sm:%s303]
    %305 = vrot.lane.b32.xlu0 %v304, 46
    %v306 = vpop.permute.xlu0 %305
    %vm307 = vcmask 89088
    %s308 = scalar_lea.vmem %s1, 134
    %309 = vst.msk [vmem:[%s308] ss:$-72 sm:$0x3] %vm307, %v306
    %s310 = scalar_lea.vmem [#allocation0], 16
    %v311 = vld [vmem:[%s310] sm:$0x3]
    %312 = vrot.lane.b32.xlu0 %v311, 43
    %v313 = vpop.permute.xlu0 %312
    %vm314 = vcmask 89088
    %s315 = scalar_lea.vmem %s1, 35
    %316 = vst.msk [vmem:[%s315] ss:$72 sm:$0x3] %vm314, %v313
    %v317 = vld [vmem:[#allocation0] sm:$0x3]
    %318 = vrot.lane.b32.xlu0 %v317, 40
    %v319 = vpop.permute.xlu0 %318
    %vm320 = vcmask 89088
    %s321 = scalar_lea.vmem %s1, 8
    %322 = vst.msk [vmem:[%s321] ss:$72 sm:$0x3] %vm320, %v319
    %s323 = scalar_lea.vmem [#allocation0], 24
    %v324 = vld [vmem:[%s323] sm:$0x3]
    %325 = vrot.lane.b32.xlu0 %v324, 39
    %v326 = vpop.permute.xlu0 %325
    %vm327 = vcmask 89088
    %s328 = scalar_lea.vmem %s1, 51
    %329 = vst.msk [vmem:[%s328] ss:$72 sm:$0x3] %vm327, %v326
    %s330 = scalar_lea.vmem [#allocation0], 9
    %s331 = smov 3
    %v332 = vld [vmem:[%s330] ss:$-1 sm:%s331]
    %333 = vrot.lane.b32.xlu0 %v332, 36
    %v334 = vpop.permute.xlu0 %333
    %vm335 = vcmask 89088
    %s336 = scalar_lea.vmem %s1, 96
    %337 = vst.msk [vmem:[%s336] ss:$-72 sm:$0x3] %vm335, %v334
    %s338 = scalar_lea.vmem [#allocation0], 33
    %s339 = smov 3
    %v340 = vld [vmem:[%s338] ss:$-1 sm:%s339]
    %341 = vrot.lane.b32.xlu0 %v340, 35
    %v342 = vpop.permute.xlu0 %341
    %vm343 = vcmask 89088
    %s344 = scalar_lea.vmem %s1, 135
    %345 = vst.msk [vmem:[%s344] ss:$-72 sm:$0x3] %vm343, %v342
    %s346 = scalar_lea.vmem [#allocation0], 16
    %v347 = vld [vmem:[%s346] sm:$0x3]
    %348 = vrot.lane.b32.xlu0 %v347, 32
    %v349 = vpop.permute.xlu0 %348
    %vm350 = vcmask 89088
    %s351 = scalar_lea.vmem %s1, 36
    %352 = vst.msk [vmem:[%s351] ss:$72 sm:$0x3] %vm350, %v349
    %v353 = vld [vmem:[#allocation0] sm:$0x3]
    %354 = vrot.lane.b32.xlu0 %v353, 29
    %v355 = vpop.permute.xlu0 %354
    %vm356 = vcmask 89088
    %s357 = scalar_lea.vmem %s1, 9
    %358 = vst.msk [vmem:[%s357] ss:$72 sm:$0x3] %vm356, %v355
    %s359 = scalar_lea.vmem [#allocation0], 24
    %v360 = vld [vmem:[%s359] sm:$0x3]
    %361 = vrot.lane.b32.xlu0 %v360, 28
    %v362 = vpop.permute.xlu0 %361
    %vm363 = vcmask 89088
    %s364 = scalar_lea.vmem %s1, 52
    %365 = vst.msk [vmem:[%s364] ss:$72 sm:$0x3] %vm363, %v362
    %s366 = scalar_lea.vmem [#allocation0], 9
    %s367 = smov 3
    %v368 = vld [vmem:[%s366] ss:$-1 sm:%s367]
    %369 = vrot.lane.b32.xlu0 %v368, 25
    %v370 = vpop.permute.xlu0 %369
    %vm371 = vcmask 89088
    %s372 = scalar_lea.vmem %s1, 97
    %373 = vst.msk [vmem:[%s372] ss:$-72 sm:$0x3] %vm371, %v370
    %s374 = scalar_lea.vmem [#allocation0], 32
    %v375 = vld [vmem:[%s374] sm:$0x3]
    %376 = vrot.lane.b32.xlu0 %v375, 24
    %v377 = vpop.permute.xlu0 %376
    %vm378 = vcmask 89088
    %s379 = scalar_lea.vmem %s1, 64
    %380 = vst.msk [vmem:[%s379] ss:$72 sm:$0x3] %vm378, %v377
    %s381 = scalar_lea.vmem [#allocation0], 16
    %v382 = vld [vmem:[%s381] sm:$0x3]
    %383 = vrot.lane.b32.xlu0 %v382, 21
    %v384 = vpop.permute.xlu0 %383
    %vm385 = vcmask 89088
    %s386 = scalar_lea.vmem %s1, 37
    %387 = vst.msk [vmem:[%s386] ss:$72 sm:$0x3] %vm385, %v384
    %v388 = vld [vmem:[#allocation0] sm:$0x3]
    %389 = vrot.lane.b32.xlu0 %v388, 18
    %v390 = vpop.permute.xlu0 %389
    %vm391 = vcmask 89088
    %s392 = scalar_lea.vmem %s1, 10
    %393 = vst.msk [vmem:[%s392] ss:$72 sm:$0x3] %vm391, %v390
    %s394 = scalar_lea.vmem [#allocation0], 24
    %v395 = vld [vmem:[%s394] sm:$0x3]
    %396 = vrot.lane.b32.xlu0 %v395, 17
    %v397 = vpop.permute.xlu0 %396
    %vm398 = vcmask 89088
    %s399 = scalar_lea.vmem %s1, 53
    %400 = vst.msk [vmem:[%s399] ss:$72 sm:$0x3] %vm398, %v397
    %s401 = scalar_lea.vmem [#allocation0], 9
    %s402 = smov 3
    %v403 = vld [vmem:[%s401] ss:$-1 sm:%s402]
    %404 = vrot.lane.b32.xlu0 %v403, 14
    %v405 = vpop.permute.xlu0 %404
    %vm406 = vcmask 89088
    %s407 = scalar_lea.vmem %s1, 98
    %408 = vst.msk [vmem:[%s407] ss:$-72 sm:$0x3] %vm406, %v405
    %s409 = scalar_lea.vmem [#allocation0], 32
    %v410 = vld [vmem:[%s409] sm:$0x3]
    %411 = vrot.lane.b32.xlu0 %v410, 13
    %v412 = vpop.permute.xlu0 %411
    %vm413 = vcmask 89088
    %s414 = scalar_lea.vmem %s1, 65
    %415 = vst.msk [vmem:[%s414] ss:$72 sm:$0x3] %vm413, %v412
    %s416 = scalar_lea.vmem [#allocation0], 16
    %v417 = vld [vmem:[%s416] sm:$0x3]
    %s418 = scalar_lea.vmem [#allocation0], 24
    %v419 = vld [vmem:[%s418] sm:$0x3]
    %vm420 = vcmask 965632
    %v421 = vsel %vm420, %v419, %v417
    %422 = vrot.lane.b32.xlu0 %v421, 10
    %v423 = vpop.permute.xlu0 %422
    %vm424 = vcmask 80896
    %s425 = scalar_lea.vmem %s1, 38
    %426 = vst.msk [vmem:[%s425] ss:$72 sm:$0x3] %vm424, %v423
    %vm427 = vcmask 89168
    %s428 = scalar_lea.vmem %s1, 38
    %429 = vst.msk [vmem:[%s428] ss:$72 sm:$0x3] %vm427, %v423
    %v430 = vld [vmem:[#allocation0] sm:$0x3]
    %s431 = scalar_lea.vmem [#allocation0], 8
    %v432 = vld [vmem:[%s431] sm:$0x3]
    %vm433 = vcmask 990208
    %v434 = vsel %vm433, %v432, %v430
    %435 = vrot.lane.b32.xlu0 %v434, 7
    %v436 = vpop.permute.xlu0 %435
    %vm437 = vcmask 56320
    %s438 = scalar_lea.vmem %s1, 11
    %439 = vst.msk [vmem:[%s438] ss:$72 sm:$0x3] %vm437, %v436
    %vm440 = vcmask 89144
    %s441 = scalar_lea.vmem %s1, 11
    %442 = vst.msk [vmem:[%s441] ss:$72 sm:$0x3] %vm440, %v436
    %s443 = scalar_lea.vmem [#allocation0], 24
    %v444 = vld [vmem:[%s443] sm:$0x3]
    %s445 = scalar_lea.vmem [#allocation0], 32
    %v446 = vld [vmem:[%s445] sm:$0x3]
    %vm447 = vcmask 998400
    %v448 = vsel %vm447, %v446, %v444
    %449 = vrot.lane.b32.xlu0 %v448, 6
    %v450 = vpop.permute.xlu0 %449
    %vm451 = vcmask 48128
    %s452 = scalar_lea.vmem %s1, 54
    %453 = vst.msk [vmem:[%s452] ss:$72 sm:$0x3] %vm451, %v450
    %vm454 = vcmask 89136
    %s455 = scalar_lea.vmem %s1, 54
    %456 = vst.msk [vmem:[%s455] ss:$72 sm:$0x3] %vm454, %v450
    %s457 = scalar_lea.vmem [#allocation0], 9
    %s458 = smov 3
    %v459 = vld [vmem:[%s457] ss:$-1 sm:%s458]
    %s460 = scalar_lea.vmem [#allocation0], 17
    %s461 = smov 3
    %v462 = vld [vmem:[%s460] ss:$-1 sm:%s461]
    %vm463 = vcmask 1022976
    %v464 = vsel %vm463, %v462, %v459
    %465 = vrot.lane.b32.xlu0 %v464, 3
    %v466 = vpop.permute.xlu0 %465
    %vm467 = vcmask 23552
    %s468 = scalar_lea.vmem %s1, 99
    %469 = vst.msk [vmem:[%s468] ss:$-72 sm:$0x3] %vm467, %v466
    %vm470 = vcmask 89112
    %s471 = scalar_lea.vmem %s1, 99
    %472 = vst.msk [vmem:[%s471] ss:$-72 sm:$0x3] %vm470, %v466
    %s473 = scalar_lea.vmem [#allocation0], 32
    %v474 = vld [vmem:[%s473] sm:$0x3]
    %s475 = scalar_lea.vmem [#allocation0], 40
    %v476 = vld [vmem:[%s475] sm:$0x3]
    %vm477 = vcmask 1031168
    %v478 = vsel %vm477, %v476, %v474
    %479 = vrot.lane.b32.xlu0 %v478, 2
    %v480 = vpop.permute.xlu0 %479
    %vm481 = vcmask 15360
    %s482 = scalar_lea.vmem %s1, 66
    %483 = vst.msk [vmem:[%s482] ss:$72 sm:$0x3] %vm481, %v480
    %vm484 = vcmask 89104
    %s485 = scalar_lea.vmem %s1, 66
    %486 = vst.msk [vmem:[%s485] ss:$72 sm:$0x3] %vm484, %v480

// kernel: wiener_deconvolution_forward.1
$region0: #{wiener_deconvolution_forward.1}
  #allocation0 [shape = 'u32[]', space=smem, size = 0x4, offset = 0x4, fixed_abs, tag = 'smem constant byte address 0x4 - core index']
  #allocation1 [shape = 'u32[144,128]{1,0:T(1,128)}', space=vmem, size = 0x12000, scoped, tag = 'internal scratch']
  %s0 = inlined_call_operand.vmem [shape: f32[2,2,660], index: 0, kind: input, shape index: {}]
  %s1 = inlined_call_operand.vmem [shape: f32[2,1,660], index: 1, kind: input, shape index: {}]
  %s2 = inlined_call_operand.vmem [shape: f32[2,2,660], index: 2, kind: output, shape index: {}]
  %s3 = sld [smem:[#allocation0]]
  $region18: #{wiener_deconvolution_forward.1} parent=0
    _
  %s5 = ssub.s32 1, %s3
  %s6 = scalar_select 0, %s5, %s3
  // Predicated region
  $region2: #{wiener_deconvolution_forward.1} parent=0 // pred_check
    _
  $region3: #{wiener_deconvolution_forward.1} parent=0 // pred_check_branch
    %8 = sbr.rel (0) target = $region5
  $region4: #{wiener_deconvolution_forward.1} parent=0 // pred_region
    _
  $region5: #{wiener_deconvolution_forward.1} parent=0 // pred_fallthru
    _
  // Predicated region
  $region6: #{wiener_deconvolution_forward.1} parent=0 // pred_check
    _
  $region7: #{wiener_deconvolution_forward.1} parent=0 // pred_check_branch
    %10 = sbr.rel (0) target = $region9
  $region8: #{wiener_deconvolution_forward.1} parent=0 // pred_region
    _
  $region9: #{wiener_deconvolution_forward.1} parent=0 // pred_fallthru
    _
  %v11 = vld [vmem:[%s0] sm:$0xff]
  %v12 = vld [vmem:[%s0 + $0x8] sm:$0xf]
  %s13 = scalar_lea.vmem %s0, 12
  %v14 = vld [vmem:[%s13] sm:$0xff]
  %v15 = vld [vmem:[%s13 + $0x8] sm:$0xf]
  %v16 = vld [vmem:[%s1] sm:$0x3f]
  %s17 = scalar_lea.vmem %s1, 6
  %v18 = vld [vmem:[%s17] sm:$0x3f]
  %v20 = vlaneseq
  %v21 = vshrl.u32 %v20, 7
  %v22 = vsub.s32 0, %v21
  %v23 = vrot.slane %v16, %v22
  %v24 = vlaneseq
  %v25 = vshrl.u32 %v24, 7
  %v26 = vsub.s32 1, %v25
  %v27 = vrot.slane %v16, %v26
  %v28 = vlaneseq
  %v29 = vshrl.u32 %v28, 7
  %v30 = vsub.s32 2, %v29
  %v31 = vrot.slane %v16, %v30
  %v32 = vlaneseq
  %v33 = vshrl.u32 %v32, 7
  %v34 = vsub.s32 3, %v33
  %v35 = vrot.slane %v16, %v34
  %v36 = vlaneseq
  %v37 = vshrl.u32 %v36, 7
  %v38 = vsub.s32 4, %v37
  %v39 = vrot.slane %v16, %v38
  %v40 = vlaneseq
  %v41 = vshrl.u32 %v40, 7
  %v42 = vsub.s32 5, %v41
  %v43 = vrot.slane %v16, %v42
  %v52 = vcombine.high %v11, %v11
  %v54 = vunpack.c.l.s4 1983009808
  %v55 = vunpack.c.0.s8 %v54
  %v56 = vlaneseq
  %v57 = vshrl.u32 %v56, 7
  %v58 = vsub.s32 %v55, %v57
  %v59 = vrot.slane %v11, %v58
  %v61 = vunpack.c.l.s4 1983009808
  %v62 = vunpack.c.0.s8 %v61
  %v63 = vlaneseq
  %v64 = vshrl.u32 %v63, 7
  %v65 = vsub.s32 %v62, %v64
  %v66 = vrot.slane %v52, %v65
  %v67 = vcombine.high %v59, %v59
  %v68 = vcombine.high %v66, %v66
  %v70 = vunpack.c.l.s4 1983009808
  %v71 = vunpack.c.0.s8 %v70
  %v72 = vlaneseq
  %v73 = vshrl.u32 %v72, 7
  %v74 = vsub.s32 %v71, %v73
  %v75 = vrot.slane %v12, %v74
  %v76 = vcombine.high %v75, %v75
  %v83 = vmul.f32 %v23, %v59
  %v84 = vmul.f32 %v27, %v67
  %v85 = vmul.f32 %v31, %v66
  %v86 = vmul.f32 %v35, %v68
  %v87 = vmul.f32 %v39, %v75
  %v88 = vmul.f32 %v43, %v76
  %v90 = vlaneseq
  %v91 = vshrl.u32 %v90, 7
  %v92 = vsub.s32 0, %v91
  %v93 = vrot.slane %v18, %v92
  %v94 = vlaneseq
  %v95 = vshrl.u32 %v94, 7
  %v96 = vsub.s32 1, %v95
  %v97 = vrot.slane %v18, %v96
  %v98 = vlaneseq
  %v99 = vshrl.u32 %v98, 7
  %v100 = vsub.s32 2, %v99
  %v101 = vrot.slane %v18, %v100
  %v102 = vlaneseq
  %v103 = vshrl.u32 %v102, 7
  %v104 = vsub.s32 3, %v103
  %v105 = vrot.slane %v18, %v104
  %v106 = vlaneseq
  %v107 = vshrl.u32 %v106, 7
  %v108 = vsub.s32 4, %v107
  %v109 = vrot.slane %v18, %v108
  %v110 = vlaneseq
  %v111 = vshrl.u32 %v110, 7
  %v112 = vsub.s32 5, %v111
  %v113 = vrot.slane %v18, %v112
  %v122 = vcombine.high %v14, %v14
  %v124 = vunpack.c.l.s4 1983009808
  %v125 = vunpack.c.0.s8 %v124
  %v126 = vlaneseq
  %v127 = vshrl.u32 %v126, 7
  %v128 = vsub.s32 %v125, %v127
  %v129 = vrot.slane %v14, %v128
  %v131 = vunpack.c.l.s4 1983009808
  %v132 = vunpack.c.0.s8 %v131
  %v133 = vlaneseq
  %v134 = vshrl.u32 %v133, 7
  %v135 = vsub.s32 %v132, %v134
  %v136 = vrot.slane %v122, %v135
  %v137 = vcombine.high %v129, %v129
  %v138 = vcombine.high %v136, %v136
  %v140 = vunpack.c.l.s4 1983009808
  %v141 = vunpack.c.0.s8 %v140
  %v142 = vlaneseq
  %v143 = vshrl.u32 %v142, 7
  %v144 = vsub.s32 %v141, %v143
  %v145 = vrot.slane %v15, %v144
  %v146 = vcombine.high %v145, %v145
  %v153 = vmul.f32 %v93, %v129
  %v154 = vmul.f32 %v97, %v137
  %v155 = vmul.f32 %v101, %v136
  %v156 = vmul.f32 %v105, %v138
  %v157 = vmul.f32 %v109, %v145
  %v158 = vmul.f32 %v113, %v146
  %v159 = vsub.f32 %v83, %v153
  %v160 = vsub.f32 %v84, %v154
  %v161 = vsub.f32 %v85, %v155
  %v162 = vsub.f32 %v86, %v156
  %v163 = vsub.f32 %v87, %v157
  %v164 = vsub.f32 %v88, %v158
  %v171 = vcombine.low %v159, %v160
  %v172 = vcombine.low %v161, %v162
  %v174 = vunpack.c.l.s4 1983009808
  %v175 = vunpack.c.0.s8 %v174
  %v176 = vlaneseq
  %v177 = vshrl.u32 %v176, 7
  %v178 = vsub.s32 %v175, %v177
  %v179 = vrot.slane %v171, %v178
  %v181 = vunpack.c.l.s4 1983009808
  %v182 = vunpack.c.0.s8 %v181
  %v183 = vlaneseq
  %v184 = vshrl.u32 %v183, 7
  %v185 = vsub.s32 %v182, %v184
  %v186 = vrot.slane %v172, %v185
  %v187 = vcombine.low %v179, %v186
  %v188 = vcombine.low %v163, %v164
  %v190 = vunpack.c.l.s4 1983009808
  %v191 = vunpack.c.0.s8 %v190
  %v192 = vlaneseq
  %v193 = vshrl.u32 %v192, 7
  %v194 = vsub.s32 %v191, %v193
  %v195 = vrot.slane %v188, %v194
  %198 = vst [vmem:[%s2] sm:$0xff] %v187
  %199 = vst [vmem:[%s2 + $0x8] sm:$0xf] %v195
  %v200 = vmul.f32 %v23, %v129
  %v201 = vmul.f32 %v27, %v137
  %v202 = vmul.f32 %v31, %v136
  %v203 = vmul.f32 %v35, %v138
  %v204 = vmul.f32 %v39, %v145
  %v205 = vmul.f32 %v43, %v146
  %v206 = vmul.f32 %v93, %v59
  %v207 = vmul.f32 %v97, %v67
  %v208 = vmul.f32 %v101, %v66
  %v209 = vmul.f32 %v105, %v68
  %v210 = vmul.f32 %v109, %v75
  %v211 = vmul.f32 %v113, %v76
  %v212 = vadd.f32 %v200, %v206
  %v213 = vadd.f32 %v201, %v207
  %v214 = vadd.f32 %v202, %v208
  %v215 = vadd.f32 %v203, %v209
  %v216 = vadd.f32 %v204, %v210
  %v217 = vadd.f32 %v205, %v211
  %v224 = vcombine.low %v212, %v213
  %v225 = vcombine.low %v214, %v215
  %v227 = vunpack.c.l.s4 1983009808
  %v228 = vunpack.c.0.s8 %v227
  %v229 = vlaneseq
  %v230 = vshrl.u32 %v229, 7
  %v231 = vsub.s32 %v228, %v230
  %v232 = vrot.slane %v224, %v231
  %v234 = vunpack.c.l.s4 1983009808
  %v235 = vunpack.c.0.s8 %v234
  %v236 = vlaneseq
  %v237 = vshrl.u32 %v236, 7
  %v238 = vsub.s32 %v235, %v237
  %v239 = vrot.slane %v225, %v238
  %v240 = vcombine.low %v232, %v239
  %v241 = vcombine.low %v216, %v217
  %v243 = vunpack.c.l.s4 1983009808
  %v244 = vunpack.c.0.s8 %v243
  %v245 = vlaneseq
  %v246 = vshrl.u32 %v245, 7
  %v247 = vsub.s32 %v244, %v246
  %v248 = vrot.slane %v241, %v247
  %s251 = scalar_lea.vmem %s2, 12
  %252 = vst [vmem:[%s251] sm:$0xff] %v240
  %253 = vst [vmem:[%s251 + $0x8] sm:$0xf] %v248
  // Predicated region
  $region10: #{wiener_deconvolution_forward.1} parent=0 // pred_check
    _
  $region11: #{wiener_deconvolution_forward.1} parent=0 // pred_check_branch
    %255 = sbr.rel (0) target = $region13
  $region12: #{wiener_deconvolution_forward.1} parent=0 // pred_region
    _
  $region13: #{wiener_deconvolution_forward.1} parent=0 // pred_fallthru
    _
  // Predicated region
  $region14: #{wiener_deconvolution_forward.1} parent=0 // pred_check
    _
  $region15: #{wiener_deconvolution_forward.1} parent=0 // pred_check_branch
    %257 = sbr.rel (0) target = $region17
  $region16: #{wiener_deconvolution_forward.1} parent=0 // pred_region
    _
  $region17: #{wiener_deconvolution_forward.1} parent=0 // pred_fallthru
    _

</llo_original>
